<compile_context>
chip_gen: v7x
topology: tpu7x:2x2x1
jax: 0.10.0
libtpu: 0.0.40
codegen_flags: <defaults>
</compile_context>

<pallas_src>
import functools

import jax
import jax.numpy as jnp
from jax.experimental import pallas as pl
from jax.experimental.pallas import tpu as pltpu

_NOUT = 128        # lane-dense output slab width (col 0 = q1, col 1 = q2, rest zero)
_SINGLE_BLOCK_F = 4096   # encoder feature dims up to this are kept resident (no K-grid)
_TK_STREAM = 512         # K-tile when the encoder weight must be streamed


def _critic_kernel(
    obs_ref, act_ref,             # (BP, TK) bf16 , (BP, A) f32
    we_ref, be_ref,               # (TK, Z) bf16 , (1, Z) f32
    w1z_ref, w1a_ref, b1_ref,     # (Z, 2Z), (A, 2Z), (1, 2Z) f32   fused twin-head layer 1
    w2_ref, b2_ref,               # (2Z, 128), (1, 128) f32         block-diag twin-head layer 2
    q_ref,                        # (BP, 128) f32 output slab
    z_acc,                        # (BP, Z) f32 scratch accumulator
):
    k = pl.program_id(0)

    @pl.when(k == 0)
    def _():
        z_acc[...] = jnp.zeros_like(z_acc)

    # Encoder GEMM, K-tiled: bf16 operands, f32 accumulation on the MXU.
    z_acc[...] += jnp.dot(obs_ref[...], we_ref[...],
                          preferred_element_type=jnp.float32)

    @pl.when(k == pl.num_programs(0) - 1)
    def _():
        # Encoder bias + ReLU (proxy for Latent).
        z = jnp.maximum(z_acc[...] + be_ref[...], 0.0)                    # (BP, Z)

        # Twin heads, layer 1 (both heads in one matmul; concat replaced by split weights).
        h = (jnp.dot(z, w1z_ref[...], preferred_element_type=jnp.float32)
             + jnp.dot(act_ref[...], w1a_ref[...], preferred_element_type=jnp.float32)
             + b1_ref[...])
        h = jnp.maximum(h, 0.0)                                           # (BP, 2Z)

        # Twin heads, layer 2: block-diagonal fused weight -> both q's in ONE matmul,
        # written to a lane-dense (BP, 128) slab (unmasked lane-wise stores).
        q_ref[...] = (jnp.dot(h, w2_ref[...], preferred_element_type=jnp.float32)
                      + b2_ref[...])


def _fuse_params(params, z_dim):
    """Split the concat weights and fuse the two heads (done once, in plain JAX)."""
    Z = z_dim
    w1a, w1b = params["w1a"], params["w1b"]                    # (Z+A, Z) each
    w1z_f = jnp.concatenate([w1a[:Z], w1b[:Z]], axis=1)        # (Z, 2Z)
    w1act_f = jnp.concatenate([w1a[Z:], w1b[Z:]], axis=1)      # (A, 2Z)
    b1_f = jnp.concatenate([params["b1a"], params["b1b"]], axis=1)  # (1, 2Z)

    w2_f = jnp.zeros((2 * Z, _NOUT), jnp.float32)              # block-diagonal
    w2_f = w2_f.at[:Z, 0].set(params["w2a"][:, 0])
    w2_f = w2_f.at[Z:, 1].set(params["w2b"][:, 0])
    b2_f = jnp.zeros((1, _NOUT), jnp.float32)
    b2_f = b2_f.at[0, 0].set(params["b2a"][0, 0])
    b2_f = b2_f.at[0, 1].set(params["b2b"][0, 0])
    return w1z_f, w1act_f, b1_f, w2_f, b2_f


@functools.partial(jax.jit, static_argnames=("z_dim",))
def critic_forward(obs_nchw, act, params, z_dim):
    """obs_nchw: (B, C, H, W) float32, act: (B, A) float32 -> (q1, q2), each (B, 1)."""
    B = obs_nchw.shape[0]
    Z = z_dim
    obs_flat = obs_nchw.reshape(B, -1)          # glue: NCHW flatten (matches Latent proxy)
    F_dim = obs_flat.shape[1]
    we = params["we"]

    # Pad batch to a multiple of 8 sublanes so every tile is a full vreg row-group
    # (the extra rows are zeros and are sliced off at the end; cost is negligible).
    BP = max(8, ((B + 7) // 8) * 8)
    if BP != B:
        obs_flat = jnp.pad(obs_flat, ((0, BP - B), (0, 0)))
        act = jnp.pad(act, ((0, BP - B), (0, 0)))

    # Encoder reduction tiling:
    #   * small feature dims -> one resident block, grid=(1,), no pipeline overhead
    #   * large feature dims -> stream the weight in lane-aligned K tiles (zeros pad
    #     the tail; zero columns do not change the dot product)
    if F_dim <= _SINGLE_BLOCK_F:
        TK = F_dim
        F_pad = F_dim
    else:
        TK = _TK_STREAM
        F_pad = ((F_dim + TK - 1) // TK) * TK
    if F_pad != F_dim:
        obs_flat = jnp.pad(obs_flat, ((0, 0), (0, F_pad - F_dim)))
        we = jnp.pad(we, ((0, F_pad - F_dim), (0, 0)))
    kt = F_pad // TK

    # Only the large streamed operands go bf16; accumulation stays f32 on the MXU.
    obs_bf16 = obs_flat.astype(jnp.bfloat16)
    we_bf16 = we.astype(jnp.bfloat16)
    act = act.astype(jnp.float32)
    A = act.shape[1]

    w1z_f, w1a_f, b1_f, w2_f, b2_f = _fuse_params(params, Z)

    grid_spec = pltpu.PrefetchScalarGridSpec(
        num_scalar_prefetch=0,
        grid=(kt,),
        in_specs=[
            pl.BlockSpec((BP, TK), lambda k: (0, k)),        # obs: K-tiled
            pl.BlockSpec((BP, A), lambda k: (0, 0)),         # act: resident
            pl.BlockSpec((TK, Z), lambda k: (k, 0)),         # we : K-tiled
            pl.BlockSpec((1, Z), lambda k: (0, 0)),          # be
            pl.BlockSpec((Z, 2 * Z), lambda k: (0, 0)),      # w1 (z-part, fused heads)
            pl.BlockSpec((A, 2 * Z), lambda k: (0, 0)),      # w1 (act-part, fused heads)
            pl.BlockSpec((1, 2 * Z), lambda k: (0, 0)),      # b1 (fused)
            pl.BlockSpec((2 * Z, _NOUT), lambda k: (0, 0)),  # w2 (block-diagonal, fused)
            pl.BlockSpec((1, _NOUT), lambda k: (0, 0)),      # b2 (fused)
        ],
        out_specs=pl.BlockSpec((BP, _NOUT), lambda k: (0, 0)),
        scratch_shapes=[pltpu.VMEM((BP, Z), jnp.float32)],
    )

    q = pl.pallas_call(
        _critic_kernel,
        out_shape=jax.ShapeDtypeStruct((BP, _NOUT), jnp.float32),
        grid_spec=grid_spec,
        compiler_params=pltpu.CompilerParams(
            dimension_semantics=("arbitrary",),   # reduction axis (accumulator-carrying)
            vmem_limit_bytes=64 << 20,
        ),
    )(obs_bf16, act, we_bf16, params["be"],
      w1z_f, w1a_f, b1_f, w2_f, b2_f)

    return q[:B, 0:1], q[:B, 1:2]


def init_params(key, feat_dim, z_dim, action_dim):
    """Deterministic synthetic parameters (shapes follow the module's __init__)."""
    ks = jax.random.split(key, 10)
    s = lambda fan_in: 1.0 / jnp.sqrt(jnp.float32(fan_in))
    ZA = z_dim + action_dim
    return {
        # encoder proxy: Linear(feat_dim -> z_dim)
        "we":  jax.random.normal(ks[0], (feat_dim, z_dim), jnp.float32) * s(feat_dim),
        "be":  jnp.zeros((1, z_dim), jnp.float32),
        # critic_1: ConvBlock(z_dim+A -> z_dim) ; ConvBlock(z_dim -> 1)
        "w1a": jax.random.normal(ks[1], (ZA, z_dim), jnp.float32) * s(ZA),
        "b1a": jnp.zeros((1, z_dim), jnp.float32),
        "w2a": jax.random.normal(ks[2], (z_dim, 1), jnp.float32) * s(z_dim),
        "b2a": jnp.zeros((1, 1), jnp.float32),
        # critic_2: independent weights, same shapes
        "w1b": jax.random.normal(ks[3], (ZA, z_dim), jnp.float32) * s(ZA),
        "b1b": jnp.zeros((1, z_dim), jnp.float32),
        "w2b": jax.random.normal(ks[4], (z_dim, 1), jnp.float32) * s(z_dim),
        "b2b": jnp.zeros((1, 1), jnp.float32),
    }


if __name__ == "__main__":
    key = jax.random.PRNGKey(0)
    k_obs, k_act, k_par = jax.random.split(key, 3)

    # small shapes consistent with the module's forward
    B, C, H, W = 2, 4, 16, 16        # obs: NCHW vision input
    action_dim = 5
    z_dim = 32
    feat_dim = C * H * W

    obs = jax.random.normal(k_obs, (B, C, H, W), jnp.float32)
    act = jax.random.normal(k_act, (B, action_dim), jnp.float32)
    params = init_params(k_par, feat_dim, z_dim, action_dim)

    q1, q2 = critic_forward(obs, act, params, z_dim=z_dim)
    jax.block_until_ready((q1, q2))

    assert q1.shape == (B, 1) and q2.shape == (B, 1)
    assert q1.dtype == jnp.float32 and q2.dtype == jnp.float32
    print("KERNEL_OK")
</pallas_src>

<mosaic_0001>
module attributes {stable_mosaic.version = 11 : i64} {
  func.func @_critic_kernel(%arg0: i32, %arg1: memref<8x1024xbf16, #tpu.memory_space<vmem>>, %arg2: memref<8x5xf32, #tpu.memory_space<vmem>>, %arg3: memref<1024x32xbf16, #tpu.memory_space<vmem>>, %arg4: memref<1x32xf32, #tpu.memory_space<vmem>>, %arg5: memref<32x64xf32, #tpu.memory_space<vmem>>, %arg6: memref<5x64xf32, #tpu.memory_space<vmem>>, %arg7: memref<1x64xf32, #tpu.memory_space<vmem>>, %arg8: memref<64x128xf32, #tpu.memory_space<vmem>>, %arg9: memref<1x128xf32, #tpu.memory_space<vmem>>, %arg10: memref<8x128xf32, #tpu.memory_space<vmem>>, %arg11: memref<8x32xf32, #tpu.memory_space<vmem>>) attributes {dimension_semantics = [#tpu.dimension_semantics<arbitrary>], iteration_bounds = array<i64: 1>, scalar_prefetch = 0 : i64, scratch_operands = 1 : i64, tpu.core_type = #tpu.core_type<tc>, window_params = [{transform_indices = @transform_0, window_bounds = array<i64: 8, 1024>}, {pipeline_mode = #tpu.pipeline_mode<synchronous>, transform_indices = @transform_1, window_bounds = array<i64: 8, 5>}, {transform_indices = @transform_2, window_bounds = array<i64: 1024, 32>}, {pipeline_mode = #tpu.pipeline_mode<synchronous>, transform_indices = @transform_3, window_bounds = array<i64: 1, 32>}, {pipeline_mode = #tpu.pipeline_mode<synchronous>, transform_indices = @transform_4, window_bounds = array<i64: 32, 64>}, {pipeline_mode = #tpu.pipeline_mode<synchronous>, transform_indices = @transform_5, window_bounds = array<i64: 5, 64>}, {pipeline_mode = #tpu.pipeline_mode<synchronous>, transform_indices = @transform_6, window_bounds = array<i64: 1, 64>}, {pipeline_mode = #tpu.pipeline_mode<synchronous>, transform_indices = @transform_7, window_bounds = array<i64: 64, 128>}, {pipeline_mode = #tpu.pipeline_mode<synchronous>, transform_indices = @transform_8, window_bounds = array<i64: 1, 128>}, {pipeline_mode = #tpu.pipeline_mode<synchronous>, transform_indices = @transform_9, window_bounds = array<i64: 8, 128>}]} {
    %c0_i32 = arith.constant 0 : i32
    %0 = arith.cmpi eq, %arg0, %c0_i32 : i32
    %1 = arith.extui %0 : i1 to i32
    %c0_i32_0 = arith.constant 0 : i32
    %2 = arith.cmpi ne, %1, %c0_i32_0 : i32
    scf.if %2 {
      %cst_10 = arith.constant 0.000000e+00 : f32
      %12 = vector.broadcast %cst_10 : f32 to vector<8x32xf32>
      %c0_11 = arith.constant 0 : index
      %c0_12 = arith.constant 0 : index
      %13 = vector.load %arg11[%c0_11, %c0_12] : memref<8x32xf32, #tpu.memory_space<vmem>>, vector<8x32xf32>
      tpu.vector_store %arg11[%c0_11, %c0_12], %12 {strides = array<i32>} : memref<8x32xf32, #tpu.memory_space<vmem>>, vector<8x32xf32>,
    } else {
    }
    %c0 = arith.constant 0 : index
    %c0_1 = arith.constant 0 : index
    %3 = vector.load %arg11[%c0, %c0_1] : memref<8x32xf32, #tpu.memory_space<vmem>>, vector<8x32xf32>
    %c0_2 = arith.constant 0 : index
    %c0_3 = arith.constant 0 : index
    %4 = vector.load %arg1[%c0_2, %c0_3] : memref<8x1024xbf16, #tpu.memory_space<vmem>>, vector<8x1024xbf16>
    %c0_4 = arith.constant 0 : index
    %c0_5 = arith.constant 0 : index
    %5 = vector.load %arg3[%c0_4, %c0_5] : memref<1024x32xbf16, #tpu.memory_space<vmem>>, vector<1024x32xbf16>
    %cst = arith.constant dense<0.000000e+00> : vector<8x32xf32>
    %6 = tpu.matmul %4, %5, %cst {dimension_numbers = #tpu.dot_dimension_numbers<[1], [0], [0], [1], [0, 0, 1, 1], [], []>} : vector<8x1024xbf16>, vector<1024x32xbf16>, vector<8x32xf32> -> vector<8x32xf32>
    %7 = arith.addf %3, %6 : vector<8x32xf32>
    %c0_6 = arith.constant 0 : index
    %c0_7 = arith.constant 0 : index
    %8 = vector.load %arg11[%c0_6, %c0_7] : memref<8x32xf32, #tpu.memory_space<vmem>>, vector<8x32xf32>
    tpu.vector_store %arg11[%c0_6, %c0_7], %7 {strides = array<i32>} : memref<8x32xf32, #tpu.memory_space<vmem>>, vector<8x32xf32>,
    %c0_i32_8 = arith.constant 0 : i32
    %9 = arith.cmpi eq, %arg0, %c0_i32_8 : i32
    %10 = arith.extui %9 : i1 to i32
    %c0_i32_9 = arith.constant 0 : i32
    %11 = arith.cmpi ne, %10, %c0_i32_9 : i32
    scf.if %11 {
      %c0_10 = arith.constant 0 : index
      %c0_11 = arith.constant 0 : index
      %12 = vector.load %arg11[%c0_10, %c0_11] : memref<8x32xf32, #tpu.memory_space<vmem>>, vector<8x32xf32>
      %c0_12 = arith.constant 0 : index
      %c0_13 = arith.constant 0 : index
      %13 = vector.load %arg4[%c0_12, %c0_13] : memref<1x32xf32, #tpu.memory_space<vmem>>, vector<1x32xf32>
      %14 = vector.broadcast %13 : vector<1x32xf32> to vector<8x32xf32>
      %15 = arith.addf %12, %14 : vector<8x32xf32>
      %cst_14 = arith.constant 0.000000e+00 : f32
      %16 = vector.broadcast %cst_14 : f32 to vector<8x32xf32>
      %17 = arith.maximumf %15, %16 : vector<8x32xf32>
      %c0_15 = arith.constant 0 : index
      %c0_16 = arith.constant 0 : index
      %18 = vector.load %arg5[%c0_15, %c0_16] : memref<32x64xf32, #tpu.memory_space<vmem>>, vector<32x64xf32>
      %cst_17 = arith.constant dense<0.000000e+00> : vector<8x64xf32>
      %19 = tpu.matmul %17, %18, %cst_17 {dimension_numbers = #tpu.dot_dimension_numbers<[1], [0], [0], [1], [0, 0, 1, 1], [], []>} : vector<8x32xf32>, vector<32x64xf32>, vector<8x64xf32> -> vector<8x64xf32>
      %c0_18 = arith.constant 0 : index
      %c0_19 = arith.constant 0 : index
      %20 = vector.load %arg2[%c0_18, %c0_19] : memref<8x5xf32, #tpu.memory_space<vmem>>, vector<8x5xf32>
      %c0_20 = arith.constant 0 : index
      %c0_21 = arith.constant 0 : index
      %21 = vector.load %arg6[%c0_20, %c0_21] : memref<5x64xf32, #tpu.memory_space<vmem>>, vector<5x64xf32>
      %cst_22 = arith.constant dense<0.000000e+00> : vector<8x64xf32>
      %22 = tpu.matmul %20, %21, %cst_22 {dimension_numbers = #tpu.dot_dimension_numbers<[1], [0], [0], [1], [0, 0, 1, 1], [], []>} : vector<8x5xf32>, vector<5x64xf32>, vector<8x64xf32> -> vector<8x64xf32>
      %23 = arith.addf %19, %22 : vector<8x64xf32>
      %c0_23 = arith.constant 0 : index
      %c0_24 = arith.constant 0 : index
      %24 = vector.load %arg7[%c0_23, %c0_24] : memref<1x64xf32, #tpu.memory_space<vmem>>, vector<1x64xf32>
      %25 = vector.broadcast %24 : vector<1x64xf32> to vector<8x64xf32>
      %26 = arith.addf %23, %25 : vector<8x64xf32>
      %cst_25 = arith.constant 0.000000e+00 : f32
      %27 = vector.broadcast %cst_25 : f32 to vector<8x64xf32>
      %28 = arith.maximumf %26, %27 : vector<8x64xf32>
      %c0_26 = arith.constant 0 : index
      %c0_27 = arith.constant 0 : index
      %29 = vector.load %arg8[%c0_26, %c0_27] : memref<64x128xf32, #tpu.memory_space<vmem>>, vector<64x128xf32>
      %cst_28 = arith.constant dense<0.000000e+00> : vector<8x128xf32>
      %30 = tpu.matmul %28, %29, %cst_28 {dimension_numbers = #tpu.dot_dimension_numbers<[1], [0], [0], [1], [0, 0, 1, 1], [], []>} : vector<8x64xf32>, vector<64x128xf32>, vector<8x128xf32> -> vector<8x128xf32>
      %c0_29 = arith.constant 0 : index
      %c0_30 = arith.constant 0 : index
      %31 = vector.load %arg9[%c0_29, %c0_30] : memref<1x128xf32, #tpu.memory_space<vmem>>, vector<1x128xf32>
      %32 = vector.broadcast %31 : vector<1x128xf32> to vector<8x128xf32>
      %33 = arith.addf %30, %32 : vector<8x128xf32>
      %c0_31 = arith.constant 0 : index
      %c0_32 = arith.constant 0 : index
      %34 = vector.load %arg10[%c0_31, %c0_32] : memref<8x128xf32, #tpu.memory_space<vmem>>, vector<8x128xf32>
      tpu.vector_store %arg10[%c0_31, %c0_32], %33 {strides = array<i32>} : memref<8x128xf32, #tpu.memory_space<vmem>>, vector<8x128xf32>,
    } else {
    }
    return
  }
  func.func @transform_0(%arg0: i32) -> (i32, i32) {
    %c0_i32 = arith.constant 0 : i32
    %c0_i32_0 = arith.constant 0 : i32
    return %c0_i32, %arg0 : i32, i32
  }
  func.func @transform_1(%arg0: i32) -> (i32, i32) {
    %c0_i32 = arith.constant 0 : i32
    %c0_i32_0 = arith.constant 0 : i32
    %c0_i32_1 = arith.constant 0 : i32
    return %c0_i32, %c0_i32_0 : i32, i32
  }
  func.func @transform_2(%arg0: i32) -> (i32, i32) {
    %c0_i32 = arith.constant 0 : i32
    %c0_i32_0 = arith.constant 0 : i32
    return %arg0, %c0_i32 : i32, i32
  }
  func.func @transform_3(%arg0: i32) -> (i32, i32) {
    %c0_i32 = arith.constant 0 : i32
    %c0_i32_0 = arith.constant 0 : i32
    %c0_i32_1 = arith.constant 0 : i32
    return %c0_i32, %c0_i32_0 : i32, i32
  }
  func.func @transform_4(%arg0: i32) -> (i32, i32) {
    %c0_i32 = arith.constant 0 : i32
    %c0_i32_0 = arith.constant 0 : i32
    %c0_i32_1 = arith.constant 0 : i32
    return %c0_i32, %c0_i32_0 : i32, i32
  }
  func.func @transform_5(%arg0: i32) -> (i32, i32) {
    %c0_i32 = arith.constant 0 : i32
    %c0_i32_0 = arith.constant 0 : i32
    %c0_i32_1 = arith.constant 0 : i32
    return %c0_i32, %c0_i32_0 : i32, i32
  }
  func.func @transform_6(%arg0: i32) -> (i32, i32) {
    %c0_i32 = arith.constant 0 : i32
    %c0_i32_0 = arith.constant 0 : i32
    %c0_i32_1 = arith.constant 0 : i32
    return %c0_i32, %c0_i32_0 : i32, i32
  }
  func.func @transform_7(%arg0: i32) -> (i32, i32) {
    %c0_i32 = arith.constant 0 : i32
    %c0_i32_0 = arith.constant 0 : i32
    %c0_i32_1 = arith.constant 0 : i32
    return %c0_i32, %c0_i32_0 : i32, i32
  }
  func.func @transform_8(%arg0: i32) -> (i32, i32) {
    %c0_i32 = arith.constant 0 : i32
    %c0_i32_0 = arith.constant 0 : i32
    %c0_i32_1 = arith.constant 0 : i32
    return %c0_i32, %c0_i32_0 : i32, i32
  }
  func.func @transform_9(%arg0: i32) -> (i32, i32) {
    %c0_i32 = arith.constant 0 : i32
    %c0_i32_0 = arith.constant 0 : i32
    %c0_i32_1 = arith.constant 0 : i32
    return %c0_i32, %c0_i32_0 : i32, i32
  }
}

</mosaic_0001>

<llo_original>
// kernel: critic_forward.1
$region0: #{critic_forward.1}
  #allocation0 [shape = 'u32[]', space=smem, size = 0x4, offset = 0x4, fixed_abs, tag = 'smem constant byte address 0x4 - core index']
  #allocation1 [shape = 'u32[144,128]{1,0:T(1,128)}', space=vmem, size = 0x12000, scoped, tag = 'internal scratch']
  #allocation2 [shape = 'f32[8,32]{1,0:T(8,128)}', space=vmem, size = 0x1000, scoped, tag = 'scratch operand']
  %s0 = inlined_call_operand.hbm [shape: bf16[8,1024], index: 0, kind: input, shape index: {}]
  %s1 = inlined_call_operand.hbm [shape: f32[8,5], index: 1, kind: input, shape index: {}]
  %s2 = inlined_call_operand.hbm [shape: bf16[1024,32], index: 2, kind: input, shape index: {}]
  %s3 = inlined_call_operand.hbm [shape: f32[1,32], index: 3, kind: input, shape index: {}]
  %s4 = inlined_call_operand.hbm [shape: f32[32,64], index: 4, kind: input, shape index: {}]
  %s5 = inlined_call_operand.hbm [shape: f32[5,64], index: 5, kind: input, shape index: {}]
  %s6 = inlined_call_operand.hbm [shape: f32[1,64], index: 6, kind: input, shape index: {}]
  %s7 = inlined_call_operand.hbm [shape: f32[64,128], index: 7, kind: input, shape index: {}]
  %s8 = inlined_call_operand.hbm [shape: f32[1,128], index: 8, kind: input, shape index: {}]
  %s9 = inlined_call_operand.hbm [shape: f32[8,128], index: 9, kind: output, shape index: {}]
  %s10 = sld [smem:[#allocation0]]
  $region90: #{critic_forward.1} parent=0
    _
  %s12 = ssub.s32 1, %s10
  %s13 = scalar_select 0, %s12, %s10
  $region1: #{critic_forward.1} parent=0
    #allocation3 [shape = 'u8[16384]{0}', space=vmem, size = 0x4000, scoped, tag = 'input window, operand 0, single buffered']
    #allocation4 [shape = 's32[1]{0}', space=sflag, size = 0x4, scoped, tag = 'scoped memory for critic_forward.1']
    #allocation5 [shape = 's32[1]{0}', space=sflag, size = 0x4, scoped, tag = 'scoped memory for critic_forward.1']
    #allocation6 [shape = 'u8[4096]{0}', space=vmem, size = 0x1000, scoped, tag = 'input window, operand 1, single buffered']
    #allocation7 [shape = 's32[1]{0}', space=sflag, size = 0x4, scoped, tag = 'scoped memory for critic_forward.1']
    #allocation8 [shape = 'u8[262144]{0}', space=vmem, size = 0x40000, scoped, tag = 'input window, operand 2, single buffered']
    #allocation9 [shape = 'u8[512]{0}', space=vmem, size = 0x400, scoped, tag = 'input window, operand 3, single buffered']
    #allocation10 [shape = 's32[1]{0}', space=sflag, size = 0x4, scoped, tag = 'scoped memory for critic_forward.1']
    #allocation11 [shape = 'u8[16384]{0}', space=vmem, size = 0x4000, scoped, tag = 'input window, operand 4, single buffered']
    #allocation12 [shape = 'u8[4096]{0}', space=vmem, size = 0x1000, scoped, tag = 'input window, operand 5, single buffered']
    #allocation13 [shape = 's32[1]{0}', space=sflag, size = 0x4, scoped, tag = 'scoped memory for critic_forward.1']
    #allocation14 [shape = 'u8[512]{0}', space=vmem, size = 0x400, scoped, tag = 'input window, operand 6, single buffered']
    #allocation15 [shape = 'u8[32768]{0}', space=vmem, size = 0x8000, scoped, tag = 'input window, operand 7, single buffered']
    #allocation16 [shape = 's32[1]{0}', space=sflag, size = 0x4, scoped, tag = 'scoped memory for critic_forward.1']
    #allocation17 [shape = 'u8[512]{0}', space=vmem, size = 0x400, scoped, tag = 'input window, operand 8, single buffered']
    #allocation18 [shape = 'u8[4096]{0}', space=vmem, size = 0x1000, scoped, tag = 'output window, operand 0, single buffered']
    %14 = vsyncpa [#allocation4], 0
    %15 = vsyncpa [#allocation7], 0
    %16 = vsyncpa [#allocation10], 0
    %17 = vsyncpa [#allocation13], 0
    %18 = vsyncpa [#allocation16], 0
    %19 = vsyncpa [#allocation5], 0
    // Predicated region
    $region2: #{critic_forward.1} parent=1 // pred_check
      _
    $region3: #{critic_forward.1} parent=1 // pred_check_branch
      %21 = sbr.rel (0) target = $region5
    $region4: #{critic_forward.1} parent=1 // pred_region
      %s23 = ssub.s32 512, 512
      %24 = vsyncadd [#allocation4], %s23
      %s26 = sshll.u32 [#allocation3], 4
      %s27 = int_to_ptr.vmem [resolvable:$true] %s26
      %29 = dma.hbm_to_vmem [thread:$0]  %s0, 512, %s27, [#allocation4]
    $region5: #{critic_forward.1} parent=1 // pred_fallthru
      _
    // Predicated region
    $region6: #{critic_forward.1} parent=1 // pred_check
      _
    $region7: #{critic_forward.1} parent=1 // pred_check_branch
      %31 = sbr.rel (0) target = $region9
    $region8: #{critic_forward.1} parent=1 // pred_region
      %s33 = ssub.s32 128, 128
      %34 = vsyncadd [#allocation7], %s33
      %s36 = sshll.u32 [#allocation6], 4
      %s37 = int_to_ptr.vmem [resolvable:$true] %s36
      %39 = dma.hbm_to_vmem [thread:$0]  %s1, 128, %s37, [#allocation7]
    $region9: #{critic_forward.1} parent=1 // pred_fallthru
      _
    // Predicated region
    $region10: #{critic_forward.1} parent=1 // pred_check
      _
    $region11: #{critic_forward.1} parent=1 // pred_check_branch
      %41 = sbr.rel (0) target = $region13
    $region12: #{critic_forward.1} parent=1 // pred_region
      %s43 = ssub.s32 8192, 8192
      %44 = vsyncadd [#allocation7], %s43
      %s45 = sshll.u32 [#allocation8], 4
      %s46 = int_to_ptr.vmem [resolvable:$true] %s45
      %51 = dma.hbm_to_vmem [thread:$0]  %s2, 8192, %s46, [#allocation7], 64, 64, 4
    $region13: #{critic_forward.1} parent=1 // pred_fallthru
      _
    // Predicated region
    $region14: #{critic_forward.1} parent=1 // pred_check
      _
    $region15: #{critic_forward.1} parent=1 // pred_check_branch
      %53 = sbr.rel (0) target = $region17
    $region16: #{critic_forward.1} parent=1 // pred_region
      %s55 = ssub.s32 16, 16
      %56 = vsyncadd [#allocation10], %s55
      %s58 = sshll.u32 [#allocation9], 4
      %s59 = int_to_ptr.vmem [resolvable:$true] %s58
      %61 = dma.hbm_to_vmem [thread:$0]  %s3, 16, %s59, [#allocation10]
    $region17: #{critic_forward.1} parent=1 // pred_fallthru
      _
    // Predicated region
    $region18: #{critic_forward.1} parent=1 // pred_check
      _
    $region19: #{critic_forward.1} parent=1 // pred_check_branch
      %63 = sbr.rel (0) target = $region21
    $region20: #{critic_forward.1} parent=1 // pred_region
      %s65 = ssub.s32 512, 512
      %66 = vsyncadd [#allocation10], %s65
      %s67 = sshll.u32 [#allocation11], 4
      %s68 = int_to_ptr.vmem [resolvable:$true] %s67
      %73 = dma.hbm_to_vmem [thread:$0]  %s4, 512, %s68, [#allocation10], 128, 128, 8
    $region21: #{critic_forward.1} parent=1 // pred_fallthru
      _
    // Predicated region
    $region22: #{critic_forward.1} parent=1 // pred_check
      _
    $region23: #{critic_forward.1} parent=1 // pred_check_branch
      %75 = sbr.rel (0) target = $region25
    $region24: #{critic_forward.1} parent=1 // pred_region
      %s77 = ssub.s32 128, 128
      %78 = vsyncadd [#allocation13], %s77
      %s80 = sshll.u32 [#allocation12], 4
      %s81 = int_to_ptr.vmem [resolvable:$true] %s80
      %83 = dma.hbm_to_vmem [thread:$0]  %s5, 128, %s81, [#allocation13]
    $region25: #{critic_forward.1} parent=1 // pred_fallthru
      _
    // Predicated region
    $region26: #{critic_forward.1} parent=1 // pred_check
      _
    $region27: #{critic_forward.1} parent=1 // pred_check_branch
      %85 = sbr.rel (0) target = $region29
    $region28: #{critic_forward.1} parent=1 // pred_region
      %s87 = ssub.s32 16, 16
      %88 = vsyncadd [#allocation13], %s87
      %s90 = sshll.u32 [#allocation14], 4
      %s91 = int_to_ptr.vmem [resolvable:$true] %s90
      %93 = dma.hbm_to_vmem [thread:$0]  %s6, 16, %s91, [#allocation13]
    $region29: #{critic_forward.1} parent=1 // pred_fallthru
      _
    // Predicated region
    $region30: #{critic_forward.1} parent=1 // pred_check
      _
    $region31: #{critic_forward.1} parent=1 // pred_check_branch
      %95 = sbr.rel (0) target = $region33
    $region32: #{critic_forward.1} parent=1 // pred_region
      %s97 = ssub.s32 1024, 1024
      %98 = vsyncadd [#allocation16], %s97
      %s99 = sshll.u32 [#allocation15], 4
      %s100 = int_to_ptr.vmem [resolvable:$true] %s99
      %105 = dma.hbm_to_vmem [thread:$0]  %s7, 1024, %s100, [#allocation16], 128, 128, 8
    $region33: #{critic_forward.1} parent=1 // pred_fallthru
      _
    // Predicated region
    $region34: #{critic_forward.1} parent=1 // pred_check
      _
    $region35: #{critic_forward.1} parent=1 // pred_check_branch
      %107 = sbr.rel (0) target = $region37
    $region36: #{critic_forward.1} parent=1 // pred_region
      %s109 = ssub.s32 16, 16
      %110 = vsyncadd [#allocation16], %s109
      %s112 = sshll.u32 [#allocation17], 4
      %s113 = int_to_ptr.vmem [resolvable:$true] %s112
      %115 = dma.hbm_to_vmem [thread:$0]  %s8, 16, %s113, [#allocation16]
    $region37: #{critic_forward.1} parent=1 // pred_fallthru
      _
    // Predicated region
    $region38: #{critic_forward.1} parent=1 // pred_check
      _
    $region39: #{critic_forward.1} parent=1 // pred_check_branch
      %117 = sbr.rel (0) target = $region41
    $region40: #{critic_forward.1} parent=1 // pred_region
      %118 = dma.done [#allocation4], 512
    $region41: #{critic_forward.1} parent=1 // pred_fallthru
      _
    // Predicated region
    $region42: #{critic_forward.1} parent=1 // pred_check
      _
    $region43: #{critic_forward.1} parent=1 // pred_check_branch
      %120 = sbr.rel (0) target = $region45
    $region44: #{critic_forward.1} parent=1 // pred_region
      %121 = dma.done [#allocation7], 128
    $region45: #{critic_forward.1} parent=1 // pred_fallthru
      _
    // Predicated region
    $region46: #{critic_forward.1} parent=1 // pred_check
      _
    $region47: #{critic_forward.1} parent=1 // pred_check_branch
      %123 = sbr.rel (0) target = $region49
    $region48: #{critic_forward.1} parent=1 // pred_region
      %124 = dma.done [#allocation7], 8192
    $region49: #{critic_forward.1} parent=1 // pred_fallthru
      _
    // Predicated region
    $region50: #{critic_forward.1} parent=1 // pred_check
      _
    $region51: #{critic_forward.1} parent=1 // pred_check_branch
      %126 = sbr.rel (0) target = $region53
    $region52: #{critic_forward.1} parent=1 // pred_region
      %127 = dma.done [#allocation10], 16
    $region53: #{critic_forward.1} parent=1 // pred_fallthru
      _
    // Predicated region
    $region54: #{critic_forward.1} parent=1 // pred_check
      _
    $region55: #{critic_forward.1} parent=1 // pred_check_branch
      %129 = sbr.rel (0) target = $region57
    $region56: #{critic_forward.1} parent=1 // pred_region
      %130 = dma.done [#allocation10], 512
    $region57: #{critic_forward.1} parent=1 // pred_fallthru
      _
    // Predicated region
    $region58: #{critic_forward.1} parent=1 // pred_check
      _
    $region59: #{critic_forward.1} parent=1 // pred_check_branch
      %132 = sbr.rel (0) target = $region61
    $region60: #{critic_forward.1} parent=1 // pred_region
      %133 = dma.done [#allocation13], 128
    $region61: #{critic_forward.1} parent=1 // pred_fallthru
      _
    // Predicated region
    $region62: #{critic_forward.1} parent=1 // pred_check
      _
    $region63: #{critic_forward.1} parent=1 // pred_check_branch
      %135 = sbr.rel (0) target = $region65
    $region64: #{critic_forward.1} parent=1 // pred_region
      %136 = dma.done [#allocation13], 16
    $region65: #{critic_forward.1} parent=1 // pred_fallthru
      _
    // Predicated region
    $region66: #{critic_forward.1} parent=1 // pred_check
      _
    $region67: #{critic_forward.1} parent=1 // pred_check_branch
      %138 = sbr.rel (0) target = $region69
    $region68: #{critic_forward.1} parent=1 // pred_region
      %139 = dma.done [#allocation16], 1024
    $region69: #{critic_forward.1} parent=1 // pred_fallthru
      _
    // Predicated region
    $region70: #{critic_forward.1} parent=1 // pred_check
      _
    $region71: #{critic_forward.1} parent=1 // pred_check_branch
      %141 = sbr.rel (0) target = $region73
    $region72: #{critic_forward.1} parent=1 // pred_region
      %142 = dma.done [#allocation16], 16
    $region73: #{critic_forward.1} parent=1 // pred_fallthru
      _
    %p144 = scmp.eq.s32.totalorder 0, 0
    // Predicated region
    $region74: #{critic_forward.1} parent=1 // pred_check
      %p145 = pneg %p144
    $region75: #{critic_forward.1} parent=1 // pred_check_branch
      %147 = sbr.rel (%p145) target = $region77
    $region76: #{critic_forward.1} parent=1 // pred_region
      %vm148 = vcmask 261120
      %149 = vst.msk [vmem:[#allocation2] sm:$0xff] %vm148, 0.0
    $region77: #{critic_forward.1} parent=1 // pred_fallthru
      _
    %v150 = vld [vmem:[#allocation2] sm:$0xff]
    %v151 = vld [vmem:[#allocation3] sm:$0xff]
    %v152 = vld [vmem:[#allocation3 + $0x8] sm:$0xff]
    %v153 = vld [vmem:[#allocation3 + $0x10] sm:$0xff]
    %v154 = vld [vmem:[#allocation3 + $0x18] sm:$0xff]
    %v155 = vld [vmem:[#allocation8] sm:$0xf]
    %v156 = vld [vmem:[#allocation8 + $0x4] sm:$0xf]
    %v157 = vld [vmem:[#allocation8 + $0x8] sm:$0xf]
    %v158 = vld [vmem:[#allocation8 + $0xc] sm:$0xf]
    %v159 = vld [vmem:[#allocation8 + $0x10] sm:$0xf]
    %v160 = vld [vmem:[#allocation8 + $0x14] sm:$0xf]
    %v161 = vld [vmem:[#allocation8 + $0x18] sm:$0xf]
    %v162 = vld [vmem:[#allocation8 + $0x1c] sm:$0xf]
    %v163 = vld [vmem:[#allocation8 + $0x20] sm:$0xf]
    %v164 = vld [vmem:[#allocation8 + $0x24] sm:$0xf]
    %v165 = vld [vmem:[#allocation8 + $0x28] sm:$0xf]
    %v166 = vld [vmem:[#allocation8 + $0x2c] sm:$0xf]
    %v167 = vld [vmem:[#allocation8 + $0x30] sm:$0xf]
    %v168 = vld [vmem:[#allocation8 + $0x34] sm:$0xf]
    %v169 = vld [vmem:[#allocation8 + $0x38] sm:$0xf]
    %v170 = vld [vmem:[#allocation8 + $0x3c] sm:$0xf]
    %v171 = vld [vmem:[#allocation8 + $0x40] sm:$0xf]
    %v172 = vld [vmem:[#allocation8 + $0x44] sm:$0xf]
    %v173 = vld [vmem:[#allocation8 + $0x48] sm:$0xf]
    %v174 = vld [vmem:[#allocation8 + $0x4c] sm:$0xf]
    %v175 = vld [vmem:[#allocation8 + $0x50] sm:$0xf]
    %v176 = vld [vmem:[#allocation8 + $0x54] sm:$0xf]
    %v177 = vld [vmem:[#allocation8 + $0x58] sm:$0xf]
    %v178 = vld [vmem:[#allocation8 + $0x5c] sm:$0xf]
    %v179 = vld [vmem:[#allocation8 + $0x60] sm:$0xf]
    %v180 = vld [vmem:[#allocation8 + $0x64] sm:$0xf]
    %v181 = vld [vmem:[#allocation8 + $0x68] sm:$0xf]
    %v182 = vld [vmem:[#allocation8 + $0x6c] sm:$0xf]
    %v183 = vld [vmem:[#allocation8 + $0x70] sm:$0xf]
    %v184 = vld [vmem:[#allocation8 + $0x74] sm:$0xf]
    %v185 = vld [vmem:[#allocation8 + $0x78] sm:$0xf]
    %v186 = vld [vmem:[#allocation8 + $0x7c] sm:$0xf]
    %v187 = vld [vmem:[#allocation8 + $0x80] sm:$0xf]
    %v188 = vld [vmem:[#allocation8 + $0x84] sm:$0xf]
    %v189 = vld [vmem:[#allocation8 + $0x88] sm:$0xf]
    %v190 = vld [vmem:[#allocation8 + $0x8c] sm:$0xf]
    %v191 = vld [vmem:[#allocation8 + $0x90] sm:$0xf]
    %v192 = vld [vmem:[#allocation8 + $0x94] sm:$0xf]
    %v193 = vld [vmem:[#allocation8 + $0x98] sm:$0xf]
    %v194 = vld [vmem:[#allocation8 + $0x9c] sm:$0xf]
    %v195 = vld [vmem:[#allocation8 + $0xa0] sm:$0xf]
    %v196 = vld [vmem:[#allocation8 + $0xa4] sm:$0xf]
    %v197 = vld [vmem:[#allocation8 + $0xa8] sm:$0xf]
    %v198 = vld [vmem:[#allocation8 + $0xac] sm:$0xf]
    %v199 = vld [vmem:[#allocation8 + $0xb0] sm:$0xf]
    %v200 = vld [vmem:[#allocation8 + $0xb4] sm:$0xf]
    %v201 = vld [vmem:[#allocation8 + $0xb8] sm:$0xf]
    %v202 = vld [vmem:[#allocation8 + $0xbc] sm:$0xf]
    %v203 = vld [vmem:[#allocation8 + $0xc0] sm:$0xf]
    %v204 = vld [vmem:[#allocation8 + $0xc4] sm:$0xf]
    %v205 = vld [vmem:[#allocation8 + $0xc8] sm:$0xf]
    %v206 = vld [vmem:[#allocation8 + $0xcc] sm:$0xf]
    %v207 = vld [vmem:[#allocation8 + $0xd0] sm:$0xf]
    %v208 = vld [vmem:[#allocation8 + $0xd4] sm:$0xf]
    %v209 = vld [vmem:[#allocation8 + $0xd8] sm:$0xf]
    %v210 = vld [vmem:[#allocation8 + $0xdc] sm:$0xf]
    %v211 = vld [vmem:[#allocation8 + $0xe0] sm:$0xf]
    %v212 = vld [vmem:[#allocation8 + $0xe4] sm:$0xf]
    %v213 = vld [vmem:[#allocation8 + $0xe8] sm:$0xf]
    %v214 = vld [vmem:[#allocation8 + $0xec] sm:$0xf]
    %v215 = vld [vmem:[#allocation8 + $0xf0] sm:$0xf]
    %v216 = vld [vmem:[#allocation8 + $0xf4] sm:$0xf]
    %v217 = vld [vmem:[#allocation8 + $0xf8] sm:$0xf]
    %v218 = vld [vmem:[#allocation8 + $0xfc] sm:$0xf]
    %v219 = vld [vmem:[#allocation8 + $0x100] sm:$0xf]
    %v220 = vld [vmem:[#allocation8 + $0x104] sm:$0xf]
    %v221 = vld [vmem:[#allocation8 + $0x108] sm:$0xf]
    %v222 = vld [vmem:[#allocation8 + $0x10c] sm:$0xf]
    %v223 = vld [vmem:[#allocation8 + $0x110] sm:$0xf]
    %v224 = vld [vmem:[#allocation8 + $0x114] sm:$0xf]
    %v225 = vld [vmem:[#allocation8 + $0x118] sm:$0xf]
    %v226 = vld [vmem:[#allocation8 + $0x11c] sm:$0xf]
    %v227 = vld [vmem:[#allocation8 + $0x120] sm:$0xf]
    %v228 = vld [vmem:[#allocation8 + $0x124] sm:$0xf]
    %v229 = vld [vmem:[#allocation8 + $0x128] sm:$0xf]
    %v230 = vld [vmem:[#allocation8 + $0x12c] sm:$0xf]
    %v231 = vld [vmem:[#allocation8 + $0x130] sm:$0xf]
    %v232 = vld [vmem:[#allocation8 + $0x134] sm:$0xf]
    %v233 = vld [vmem:[#allocation8 + $0x138] sm:$0xf]
    %v234 = vld [vmem:[#allocation8 + $0x13c] sm:$0xf]
    %v235 = vld [vmem:[#allocation8 + $0x140] sm:$0xf]
    %v236 = vld [vmem:[#allocation8 + $0x144] sm:$0xf]
    %v237 = vld [vmem:[#allocation8 + $0x148] sm:$0xf]
    %v238 = vld [vmem:[#allocation8 + $0x14c] sm:$0xf]
    %v239 = vld [vmem:[#allocation8 + $0x150] sm:$0xf]
    %v240 = vld [vmem:[#allocation8 + $0x154] sm:$0xf]
    %v241 = vld [vmem:[#allocation8 + $0x158] sm:$0xf]
    %v242 = vld [vmem:[#allocation8 + $0x15c] sm:$0xf]
    %v243 = vld [vmem:[#allocation8 + $0x160] sm:$0xf]
    %v244 = vld [vmem:[#allocation8 + $0x164] sm:$0xf]
    %v245 = vld [vmem:[#allocation8 + $0x168] sm:$0xf]
    %v246 = vld [vmem:[#allocation8 + $0x16c] sm:$0xf]
    %v247 = vld [vmem:[#allocation8 + $0x170] sm:$0xf]
    %v248 = vld [vmem:[#allocation8 + $0x174] sm:$0xf]
    %v249 = vld [vmem:[#allocation8 + $0x178] sm:$0xf]
    %v250 = vld [vmem:[#allocation8 + $0x17c] sm:$0xf]
    %v251 = vld [vmem:[#allocation8 + $0x180] sm:$0xf]
    %v252 = vld [vmem:[#allocation8 + $0x184] sm:$0xf]
    %v253 = vld [vmem:[#allocation8 + $0x188] sm:$0xf]
    %v254 = vld [vmem:[#allocation8 + $0x18c] sm:$0xf]
    %v255 = vld [vmem:[#allocation8 + $0x190] sm:$0xf]
    %v256 = vld [vmem:[#allocation8 + $0x194] sm:$0xf]
    %v257 = vld [vmem:[#allocation8 + $0x198] sm:$0xf]
    %v258 = vld [vmem:[#allocation8 + $0x19c] sm:$0xf]
    %v259 = vld [vmem:[#allocation8 + $0x1a0] sm:$0xf]
    %v260 = vld [vmem:[#allocation8 + $0x1a4] sm:$0xf]
    %v261 = vld [vmem:[#allocation8 + $0x1a8] sm:$0xf]
    %v262 = vld [vmem:[#allocation8 + $0x1ac] sm:$0xf]
    %v263 = vld [vmem:[#allocation8 + $0x1b0] sm:$0xf]
    %v264 = vld [vmem:[#allocation8 + $0x1b4] sm:$0xf]
    %v265 = vld [vmem:[#allocation8 + $0x1b8] sm:$0xf]
    %v266 = vld [vmem:[#allocation8 + $0x1bc] sm:$0xf]
    %v267 = vld [vmem:[#allocation8 + $0x1c0] sm:$0xf]
    %v268 = vld [vmem:[#allocation8 + $0x1c4] sm:$0xf]
    %v269 = vld [vmem:[#allocation8 + $0x1c8] sm:$0xf]
    %v270 = vld [vmem:[#allocation8 + $0x1cc] sm:$0xf]
    %v271 = vld [vmem:[#allocation8 + $0x1d0] sm:$0xf]
    %v272 = vld [vmem:[#allocation8 + $0x1d4] sm:$0xf]
    %v273 = vld [vmem:[#allocation8 + $0x1d8] sm:$0xf]
    %v274 = vld [vmem:[#allocation8 + $0x1dc] sm:$0xf]
    %v275 = vld [vmem:[#allocation8 + $0x1e0] sm:$0xf]
    %v276 = vld [vmem:[#allocation8 + $0x1e4] sm:$0xf]
    %v277 = vld [vmem:[#allocation8 + $0x1e8] sm:$0xf]
    %v278 = vld [vmem:[#allocation8 + $0x1ec] sm:$0xf]
    %v279 = vld [vmem:[#allocation8 + $0x1f0] sm:$0xf]
    %v280 = vld [vmem:[#allocation8 + $0x1f4] sm:$0xf]
    %v281 = vld [vmem:[#allocation8 + $0x1f8] sm:$0xf]
    %v282 = vld [vmem:[#allocation8 + $0x1fc] sm:$0xf]
    %v287 = vunpack.c.l.b16 %v151
    %v288 = vunpack.c.h.b16 %v151
    %v289 = vunpack.c.l.b16 %v152
    %v290 = vunpack.c.h.b16 %v152
    %v291 = vunpack.c.l.b16 %v153
    %v292 = vunpack.c.h.b16 %v153
    %v293 = vunpack.c.l.b16 %v154
    %v294 = vunpack.c.h.b16 %v154
    %v295 = vpack.c.b16 %v287, %v287
    %v296 = vpack.c.b16 %v288, %v288
    %v297 = vpack.c.b16 %v289, %v289
    %v298 = vpack.c.b16 %v290, %v290
    %v299 = vpack.c.b16 %v291, %v291
    %v300 = vpack.c.b16 %v292, %v292
    %v301 = vpack.c.b16 %v293, %v293
    %v302 = vpack.c.b16 %v294, %v294
    %v439 = vunpack.c.l.b16 %v155
    %v440 = vunpack.c.l.b16 %v156
    %v441 = vunpack.c.l.b16 %v157
    %v442 = vunpack.c.l.b16 %v158
    %v443 = vunpack.c.l.b16 %v159
    %v444 = vunpack.c.l.b16 %v160
    %v445 = vunpack.c.l.b16 %v161
    %v446 = vunpack.c.l.b16 %v162
    %v447 = vunpack.c.l.b16 %v163
    %v448 = vunpack.c.l.b16 %v164
    %v449 = vunpack.c.l.b16 %v165
    %v450 = vunpack.c.l.b16 %v166
    %v451 = vunpack.c.l.b16 %v167
    %v452 = vunpack.c.l.b16 %v168
    %v453 = vunpack.c.l.b16 %v169
    %v454 = vunpack.c.l.b16 %v170
    %v455 = vunpack.c.l.b16 %v171
    %v456 = vunpack.c.l.b16 %v172
    %v457 = vunpack.c.l.b16 %v173
    %v458 = vunpack.c.l.b16 %v174
    %v459 = vunpack.c.l.b16 %v175
    %v460 = vunpack.c.l.b16 %v176
    %v461 = vunpack.c.l.b16 %v177
    %v462 = vunpack.c.l.b16 %v178
    %v463 = vunpack.c.l.b16 %v179
    %v464 = vunpack.c.l.b16 %v180
    %v465 = vunpack.c.l.b16 %v181
    %v466 = vunpack.c.l.b16 %v182
    %v467 = vunpack.c.l.b16 %v183
    %v468 = vunpack.c.l.b16 %v184
    %v469 = vunpack.c.l.b16 %v185
    %v470 = vunpack.c.l.b16 %v186
    %v471 = vunpack.c.l.b16 %v187
    %v472 = vunpack.c.l.b16 %v188
    %v473 = vunpack.c.l.b16 %v189
    %v474 = vunpack.c.l.b16 %v190
    %v475 = vunpack.c.l.b16 %v191
    %v476 = vunpack.c.l.b16 %v192
    %v477 = vunpack.c.l.b16 %v193
    %v478 = vunpack.c.l.b16 %v194
    %v479 = vunpack.c.l.b16 %v195
    %v480 = vunpack.c.l.b16 %v196
    %v481 = vunpack.c.l.b16 %v197
    %v482 = vunpack.c.l.b16 %v198
    %v483 = vunpack.c.l.b16 %v199
    %v484 = vunpack.c.l.b16 %v200
    %v485 = vunpack.c.l.b16 %v201
    %v486 = vunpack.c.l.b16 %v202
    %v487 = vunpack.c.l.b16 %v203
    %v488 = vunpack.c.l.b16 %v204
    %v489 = vunpack.c.l.b16 %v205
    %v490 = vunpack.c.l.b16 %v206
    %v491 = vunpack.c.l.b16 %v207
    %v492 = vunpack.c.l.b16 %v208
    %v493 = vunpack.c.l.b16 %v209
    %v494 = vunpack.c.l.b16 %v210
    %v495 = vunpack.c.l.b16 %v211
    %v496 = vunpack.c.l.b16 %v212
    %v497 = vunpack.c.l.b16 %v213
    %v498 = vunpack.c.l.b16 %v214
    %v499 = vunpack.c.l.b16 %v215
    %v500 = vunpack.c.l.b16 %v216
    %v501 = vunpack.c.l.b16 %v217
    %v502 = vunpack.c.l.b16 %v218
    %v503 = vunpack.c.l.b16 %v219
    %v504 = vunpack.c.l.b16 %v220
    %v505 = vunpack.c.l.b16 %v221
    %v506 = vunpack.c.l.b16 %v222
    %v507 = vunpack.c.l.b16 %v223
    %v508 = vunpack.c.l.b16 %v224
    %v509 = vunpack.c.l.b16 %v225
    %v510 = vunpack.c.l.b16 %v226
    %v511 = vunpack.c.l.b16 %v227
    %v512 = vunpack.c.l.b16 %v228
    %v513 = vunpack.c.l.b16 %v229
    %v514 = vunpack.c.l.b16 %v230
    %v515 = vunpack.c.l.b16 %v231
    %v516 = vunpack.c.l.b16 %v232
    %v517 = vunpack.c.l.b16 %v233
    %v518 = vunpack.c.l.b16 %v234
    %v519 = vunpack.c.l.b16 %v235
    %v520 = vunpack.c.l.b16 %v236
    %v521 = vunpack.c.l.b16 %v237
    %v522 = vunpack.c.l.b16 %v238
    %v523 = vunpack.c.l.b16 %v239
    %v524 = vunpack.c.l.b16 %v240
    %v525 = vunpack.c.l.b16 %v241
    %v526 = vunpack.c.l.b16 %v242
    %v527 = vunpack.c.l.b16 %v243
    %v528 = vunpack.c.l.b16 %v244
    %v529 = vunpack.c.l.b16 %v245
    %v530 = vunpack.c.l.b16 %v246
    %v531 = vunpack.c.l.b16 %v247
    %v532 = vunpack.c.l.b16 %v248
    %v533 = vunpack.c.l.b16 %v249
    %v534 = vunpack.c.l.b16 %v250
    %v535 = vunpack.c.l.b16 %v251
    %v536 = vunpack.c.l.b16 %v252
    %v537 = vunpack.c.l.b16 %v253
    %v538 = vunpack.c.l.b16 %v254
    %v539 = vunpack.c.l.b16 %v255
    %v540 = vunpack.c.l.b16 %v256
    %v541 = vunpack.c.l.b16 %v257
    %v542 = vunpack.c.l.b16 %v258
    %v543 = vunpack.c.l.b16 %v259
    %v544 = vunpack.c.l.b16 %v260
    %v545 = vunpack.c.l.b16 %v261
    %v546 = vunpack.c.l.b16 %v262
    %v547 = vunpack.c.l.b16 %v263
    %v548 = vunpack.c.l.b16 %v264
    %v549 = vunpack.c.l.b16 %v265
    %v550 = vunpack.c.l.b16 %v266
    %v551 = vunpack.c.l.b16 %v267
    %v552 = vunpack.c.l.b16 %v268
    %v553 = vunpack.c.l.b16 %v269
    %v554 = vunpack.c.l.b16 %v270
    %v555 = vunpack.c.l.b16 %v271
    %v556 = vunpack.c.l.b16 %v272
    %v557 = vunpack.c.l.b16 %v273
    %v558 = vunpack.c.l.b16 %v274
    %v559 = vunpack.c.l.b16 %v275
    %v560 = vunpack.c.l.b16 %v276
    %v561 = vunpack.c.l.b16 %v277
    %v562 = vunpack.c.l.b16 %v278
    %v563 = vunpack.c.l.b16 %v279
    %v564 = vunpack.c.l.b16 %v280
    %v565 = vunpack.c.l.b16 %v281
    %v566 = vunpack.c.l.b16 %v282
    %v567 = vpack.c.b16 %v440, %v439
    %v568 = vpack.c.b16 %v442, %v441
    %v569 = vpack.c.b16 %v444, %v443
    %v570 = vpack.c.b16 %v446, %v445
    %v571 = vpack.c.b16 %v448, %v447
    %v572 = vpack.c.b16 %v450, %v449
    %v573 = vpack.c.b16 %v452, %v451
    %v574 = vpack.c.b16 %v454, %v453
    %v575 = vpack.c.b16 %v456, %v455
    %v576 = vpack.c.b16 %v458, %v457
    %v577 = vpack.c.b16 %v460, %v459
    %v578 = vpack.c.b16 %v462, %v461
    %v579 = vpack.c.b16 %v464, %v463
    %v580 = vpack.c.b16 %v466, %v465
    %v581 = vpack.c.b16 %v468, %v467
    %v582 = vpack.c.b16 %v470, %v469
    %v583 = vpack.c.b16 %v472, %v471
    %v584 = vpack.c.b16 %v474, %v473
    %v585 = vpack.c.b16 %v476, %v475
    %v586 = vpack.c.b16 %v478, %v477
    %v587 = vpack.c.b16 %v480, %v479
    %v588 = vpack.c.b16 %v482, %v481
    %v589 = vpack.c.b16 %v484, %v483
    %v590 = vpack.c.b16 %v486, %v485
    %v591 = vpack.c.b16 %v488, %v487
    %v592 = vpack.c.b16 %v490, %v489
    %v593 = vpack.c.b16 %v492, %v491
    %v594 = vpack.c.b16 %v494, %v493
    %v595 = vpack.c.b16 %v496, %v495
    %v596 = vpack.c.b16 %v498, %v497
    %v597 = vpack.c.b16 %v500, %v499
    %v598 = vpack.c.b16 %v502, %v501
    %v599 = vpack.c.b16 %v504, %v503
    %v600 = vpack.c.b16 %v506, %v505
    %v601 = vpack.c.b16 %v508, %v507
    %v602 = vpack.c.b16 %v510, %v509
    %v603 = vpack.c.b16 %v512, %v511
    %v604 = vpack.c.b16 %v514, %v513
    %v605 = vpack.c.b16 %v516, %v515
    %v606 = vpack.c.b16 %v518, %v517
    %v607 = vpack.c.b16 %v520, %v519
    %v608 = vpack.c.b16 %v522, %v521
    %v609 = vpack.c.b16 %v524, %v523
    %v610 = vpack.c.b16 %v526, %v525
    %v611 = vpack.c.b16 %v528, %v527
    %v612 = vpack.c.b16 %v530, %v529
    %v613 = vpack.c.b16 %v532, %v531
    %v614 = vpack.c.b16 %v534, %v533
    %v615 = vpack.c.b16 %v536, %v535
    %v616 = vpack.c.b16 %v538, %v537
    %v617 = vpack.c.b16 %v540, %v539
    %v618 = vpack.c.b16 %v542, %v541
    %v619 = vpack.c.b16 %v544, %v543
    %v620 = vpack.c.b16 %v546, %v545
    %v621 = vpack.c.b16 %v548, %v547
    %v622 = vpack.c.b16 %v550, %v549
    %v623 = vpack.c.b16 %v552, %v551
    %v624 = vpack.c.b16 %v554, %v553
    %v625 = vpack.c.b16 %v556, %v555
    %v626 = vpack.c.b16 %v558, %v557
    %v627 = vpack.c.b16 %v560, %v559
    %v628 = vpack.c.b16 %v562, %v561
    %v629 = vpack.c.b16 %v564, %v563
    %v630 = vpack.c.b16 %v566, %v565
    %695 = vmatprep.subr.bf16.mxu0 0
    %696 = vmatpush1.bf16.msra.mxu0 %v567
    %697 = vmatprep.subr.bf16.mxu0 0
    %698 = vmatpush1.bf16.msra.mxu0 %v568
    %699 = vmatprep.subr.bf16.mxu0 0
    %700 = vmatpush1.bf16.msra.mxu0 %v569
    %701 = vmatprep.subr.bf16.mxu0 0
    %702 = vmatpush1.bf16.msra.mxu0 %v570
    %703 = vmatprep.subr.bf16.mxu0 0
    %704 = vmatpush1.bf16.msra.mxu0 %v571
    %705 = vmatprep.subr.bf16.mxu0 0
    %706 = vmatpush1.bf16.msra.mxu0 %v572
    %707 = vmatprep.subr.bf16.mxu0 0
    %708 = vmatpush1.bf16.msra.mxu0 %v573
    %709 = vmatprep.subr.bf16.mxu0 0
    %710 = vmatpush1.bf16.msra.mxu0 %v574
    %711 = vmatprep.subr.bf16.mxu0 0
    %712 = vmatpush1.bf16.msra.mxu0 %v575
    %713 = vmatprep.subr.bf16.mxu0 0
    %714 = vmatpush1.bf16.msra.mxu0 %v576
    %715 = vmatprep.subr.bf16.mxu0 0
    %716 = vmatpush1.bf16.msra.mxu0 %v577
    %717 = vmatprep.subr.bf16.mxu0 0
    %718 = vmatpush1.bf16.msra.mxu0 %v578
    %719 = vmatprep.subr.bf16.mxu0 0
    %720 = vmatpush1.bf16.msra.mxu0 %v579
    %721 = vmatprep.subr.bf16.mxu0 0
    %722 = vmatpush1.bf16.msra.mxu0 %v580
    %723 = vmatprep.subr.bf16.mxu0 0
    %724 = vmatpush1.bf16.msra.mxu0 %v581
    %725 = vmatprep.subr.bf16.mxu0 0
    %726 = vmatpush1.bf16.msra.mxu0 %v582
    %727 = vmatprep.mubr.bf16.mxu0 %v296
    %728 = vmatmul.mubr.bf16.gmra.mrb[0].mxu0 %v295
    %v729 = vpop.f32.mrb[0].mxu0
    %v730 = vadd.f32 0.0, %v729
    %v731 = vpop.f32.mrb[0].mxu0
    %v732 = vpop.f32.mrb[0].mxu0
    %v733 = vpop.f32.mrb[0].mxu0
    %734 = vdwg.mxu0
    %735 = vmatprep.subr.bf16.mxu0 0
    %736 = vmatpush1.bf16.msra.mxu0 %v583
    %737 = vmatprep.subr.bf16.mxu0 0
    %738 = vmatpush1.bf16.msra.mxu0 %v584
    %739 = vmatprep.subr.bf16.mxu0 0
    %740 = vmatpush1.bf16.msra.mxu0 %v585
    %741 = vmatprep.subr.bf16.mxu0 0
    %742 = vmatpush1.bf16.msra.mxu0 %v586
    %743 = vmatprep.subr.bf16.mxu0 0
    %744 = vmatpush1.bf16.msra.mxu0 %v587
    %745 = vmatprep.subr.bf16.mxu0 0
    %746 = vmatpush1.bf16.msra.mxu0 %v588
    %747 = vmatprep.subr.bf16.mxu0 0
    %748 = vmatpush1.bf16.msra.mxu0 %v589
    %749 = vmatprep.subr.bf16.mxu0 0
    %750 = vmatpush1.bf16.msra.mxu0 %v590
    %751 = vmatprep.subr.bf16.mxu0 0
    %752 = vmatpush1.bf16.msra.mxu0 %v591
    %753 = vmatprep.subr.bf16.mxu0 0
    %754 = vmatpush1.bf16.msra.mxu0 %v592
    %755 = vmatprep.subr.bf16.mxu0 0
    %756 = vmatpush1.bf16.msra.mxu0 %v593
    %757 = vmatprep.subr.bf16.mxu0 0
    %758 = vmatpush1.bf16.msra.mxu0 %v594
    %759 = vmatprep.subr.bf16.mxu0 0
    %760 = vmatpush1.bf16.msra.mxu0 %v595
    %761 = vmatprep.subr.bf16.mxu0 0
    %762 = vmatpush1.bf16.msra.mxu0 %v596
    %763 = vmatprep.subr.bf16.mxu0 0
    %764 = vmatpush1.bf16.msra.mxu0 %v597
    %765 = vmatprep.subr.bf16.mxu0 0
    %766 = vmatpush1.bf16.msra.mxu0 %v598
    %767 = vmatprep.mubr.bf16.mxu0 %v298
    %768 = vmatmul.mubr.bf16.gmra.mrb[0].mxu0 %v297
    %v769 = vpop.f32.mrb[0].mxu0
    %v770 = vadd.f32 %v730, %v769
    %v771 = vpop.f32.mrb[0].mxu0
    %v772 = vpop.f32.mrb[0].mxu0
    %v773 = vpop.f32.mrb[0].mxu0
    %774 = vdwg.mxu0
    %775 = vmatprep.subr.bf16.mxu0 0
    %776 = vmatpush1.bf16.msra.mxu0 %v599
    %777 = vmatprep.subr.bf16.mxu0 0
    %778 = vmatpush1.bf16.msra.mxu0 %v600
    %779 = vmatprep.subr.bf16.mxu0 0
    %780 = vmatpush1.bf16.msra.mxu0 %v601
    %781 = vmatprep.subr.bf16.mxu0 0
    %782 = vmatpush1.bf16.msra.mxu0 %v602
    %783 = vmatprep.subr.bf16.mxu0 0
    %784 = vmatpush1.bf16.msra.mxu0 %v603
    %785 = vmatprep.subr.bf16.mxu0 0
    %786 = vmatpush1.bf16.msra.mxu0 %v604
    %787 = vmatprep.subr.bf16.mxu0 0
    %788 = vmatpush1.bf16.msra.mxu0 %v605
    %789 = vmatprep.subr.bf16.mxu0 0
    %790 = vmatpush1.bf16.msra.mxu0 %v606
    %791 = vmatprep.subr.bf16.mxu0 0
    %792 = vmatpush1.bf16.msra.mxu0 %v607
    %793 = vmatprep.subr.bf16.mxu0 0
    %794 = vmatpush1.bf16.msra.mxu0 %v608
    %795 = vmatprep.subr.bf16.mxu0 0
    %796 = vmatpush1.bf16.msra.mxu0 %v609
    %797 = vmatprep.subr.bf16.mxu0 0
    %798 = vmatpush1.bf16.msra.mxu0 %v610
    %799 = vmatprep.subr.bf16.mxu0 0
    %800 = vmatpush1.bf16.msra.mxu0 %v611
    %801 = vmatprep.subr.bf16.mxu0 0
    %802 = vmatpush1.bf16.msra.mxu0 %v612
    %803 = vmatprep.subr.bf16.mxu0 0
    %804 = vmatpush1.bf16.msra.mxu0 %v613
    %805 = vmatprep.subr.bf16.mxu0 0
    %806 = vmatpush1.bf16.msra.mxu0 %v614
    %807 = vmatprep.mubr.bf16.mxu0 %v300
    %808 = vmatmul.mubr.bf16.gmra.mrb[0].mxu0 %v299
    %v809 = vpop.f32.mrb[0].mxu0
    %v810 = vadd.f32 %v770, %v809
    %v811 = vpop.f32.mrb[0].mxu0
    %v812 = vpop.f32.mrb[0].mxu0
    %v813 = vpop.f32.mrb[0].mxu0
    %814 = vdwg.mxu0
    %815 = vmatprep.subr.bf16.mxu0 0
    %816 = vmatpush1.bf16.msra.mxu0 %v615
    %817 = vmatprep.subr.bf16.mxu0 0
    %818 = vmatpush1.bf16.msra.mxu0 %v616
    %819 = vmatprep.subr.bf16.mxu0 0
    %820 = vmatpush1.bf16.msra.mxu0 %v617
    %821 = vmatprep.subr.bf16.mxu0 0
    %822 = vmatpush1.bf16.msra.mxu0 %v618
    %823 = vmatprep.subr.bf16.mxu0 0
    %824 = vmatpush1.bf16.msra.mxu0 %v619
    %825 = vmatprep.subr.bf16.mxu0 0
    %826 = vmatpush1.bf16.msra.mxu0 %v620
    %827 = vmatprep.subr.bf16.mxu0 0
    %828 = vmatpush1.bf16.msra.mxu0 %v621
    %829 = vmatprep.subr.bf16.mxu0 0
    %830 = vmatpush1.bf16.msra.mxu0 %v622
    %831 = vmatprep.subr.bf16.mxu0 0
    %832 = vmatpush1.bf16.msra.mxu0 %v623
    %833 = vmatprep.subr.bf16.mxu0 0
    %834 = vmatpush1.bf16.msra.mxu0 %v624
    %835 = vmatprep.subr.bf16.mxu0 0
    %836 = vmatpush1.bf16.msra.mxu0 %v625
    %837 = vmatprep.subr.bf16.mxu0 0
    %838 = vmatpush1.bf16.msra.mxu0 %v626
    %839 = vmatprep.subr.bf16.mxu0 0
    %840 = vmatpush1.bf16.msra.mxu0 %v627
    %841 = vmatprep.subr.bf16.mxu0 0
    %842 = vmatpush1.bf16.msra.mxu0 %v628
    %843 = vmatprep.subr.bf16.mxu0 0
    %844 = vmatpush1.bf16.msra.mxu0 %v629
    %845 = vmatprep.subr.bf16.mxu0 0
    %846 = vmatpush1.bf16.msra.mxu0 %v630
    %847 = vmatprep.mubr.bf16.mxu0 %v302
    %848 = vmatmul.mubr.bf16.gmra.mrb[0].mxu0 %v301
    %v849 = vpop.f32.mrb[0].mxu0
    %v850 = vadd.f32 %v810, %v849
    %v851 = vpop.f32.mrb[0].mxu0
    %v852 = vpop.f32.mrb[0].mxu0
    %v853 = vpop.f32.mrb[0].mxu0
    %854 = vdwg.mxu0
    %v855 = vadd.f32 %v150, %v850
    %vm856 = vcmask 261120
    %857 = vst.msk [vmem:[#allocation2] sm:$0xff] %vm856, %v855
    // Predicated region
    $region78: #{critic_forward.1} parent=1 // pred_check
      %p858 = pneg %p144
    $region79: #{critic_forward.1} parent=1 // pred_check_branch
      %860 = sbr.rel (%p858) target = $region81
    $region80: #{critic_forward.1} parent=1 // pred_region
      %v861 = vld [vmem:[#allocation2] sm:$0xff]
      %v862 = vld [vmem:[#allocation9] sm:$0x1]
      %v864 = vlaneseq
      %v865 = vshrl.u32 %v864, 7
      %v866 = vsub.s32 0, %v865
      %v867 = vrot.slane %v862, %v866
      %v869 = vadd.f32 %v861, %v867
      %v870 = vmax.f32 %v869, 0.0
      %v871 = vld [vmem:[#allocation11] sm:$0xff]
      %v872 = vld [vmem:[#allocation11 + $0x8] sm:$0xff]
      %v873 = vld [vmem:[#allocation11 + $0x10] sm:$0xff]
      %v874 = vld [vmem:[#allocation11 + $0x18] sm:$0xff]
      %v875 = vld [vmem:[#allocation6] sm:$0xff]
      %v876 = vld [vmem:[#allocation12] sm:$0x1f]
      %vm877 = vcmask 39936
      %v879 = vsel %vm877, %v875, 0
      %vm881 = vcmask 1044480
      %v883 = vsel %vm881, %v876, 0
      %885 = vmatprep.subr.mxu0 0.0
      %886 = vmatpush1.msra.mxu0 %v883
      %887 = vmatprep.subr.mxu0 0.0
      %888 = vmatpush1.msra.mxu0 0.0
      %889 = vmatprep.subr.mxu0 0.0
      %890 = vmatpush1.msra.mxu0 0.0
      %891 = vmatprep.subr.mxu0 0.0
      %892 = vmatpush1.msra.mxu0 0.0
      %893 = vmatprep.subr.mxu0 0.0
      %894 = vmatpush1.msra.mxu0 0.0
      %895 = vmatprep.subr.mxu0 0.0
      %896 = vmatpush1.msra.mxu0 0.0
      %897 = vmatprep.subr.mxu0 0.0
      %898 = vmatpush1.msra.mxu0 0.0
      %899 = vmatprep.subr.mxu0 0.0
      %900 = vmatpush1.msra.mxu0 0.0
      %901 = vmatprep.subr.mxu0 0.0
      %902 = vmatpush1.msra.mxu0 0.0
      %903 = vmatprep.subr.mxu0 0.0
      %904 = vmatpush1.msra.mxu0 0.0
      %905 = vmatprep.subr.mxu0 0.0
      %906 = vmatpush1.msra.mxu0 0.0
      %907 = vmatprep.subr.mxu0 0.0
      %908 = vmatpush1.msra.mxu0 0.0
      %909 = vmatprep.subr.mxu0 0.0
      %910 = vmatpush1.msra.mxu0 0.0
      %911 = vmatprep.subr.mxu0 0.0
      %912 = vmatpush1.msra.mxu0 0.0
      %913 = vmatprep.subr.mxu0 0.0
      %914 = vmatpush1.msra.mxu0 0.0
      %915 = vmatprep.subr.mxu0 0.0
      %916 = vmatpush1.msra.mxu0 0.0
      %917 = vmatprep.subr.mxu0 0.0
      %918 = vmatpush1.msra.mxu0 0.0
      %919 = vmatprep.subr.mxu0 0.0
      %920 = vmatpush1.msra.mxu0 0.0
      %921 = vmatprep.subr.mxu0 0.0
      %922 = vmatpush1.msra.mxu0 0.0
      %923 = vmatprep.subr.mxu0 0.0
      %924 = vmatpush1.msra.mxu0 0.0
      %925 = vmatprep.subr.mxu0 0.0
      %926 = vmatpush1.msra.mxu0 0.0
      %927 = vmatprep.subr.mxu0 0.0
      %928 = vmatpush1.msra.mxu0 0.0
      %929 = vmatprep.subr.mxu0 0.0
      %930 = vmatpush1.msra.mxu0 0.0
      %931 = vmatprep.subr.mxu0 0.0
      %932 = vmatpush1.msra.mxu0 0.0
      %933 = vmatprep.subr.mxu0 0.0
      %934 = vmatpush1.msra.mxu0 0.0
      %935 = vmatprep.subr.mxu0 0.0
      %936 = vmatpush1.msra.mxu0 0.0
      %937 = vmatprep.subr.mxu0 0.0
      %938 = vmatpush1.msra.mxu0 0.0
      %939 = vmatprep.subr.mxu0 0.0
      %940 = vmatpush1.msra.mxu0 0.0
      %941 = vmatprep.subr.mxu0 0.0
      %942 = vmatpush1.msra.mxu0 0.0
      %943 = vmatprep.subr.mxu0 0.0
      %944 = vmatpush1.msra.mxu0 0.0
      %945 = vmatprep.subr.mxu0 0.0
      %946 = vmatpush1.msra.mxu0 0.0
      %947 = vmatprep.subr.mxu0 0.0
      %948 = vmatpush1.msra.mxu0 0.0
      %949 = vmatprep.mubr.f32.mxu0 0.0
      %950 = vmatmul.mubr.f32.gmra.mrb[0].mxu0 %v879
      %v951 = vpop.f32.mrb[0].mxu0
      %v952 = vadd.f32 0.0, %v951
      %v953 = vpop.f32.mrb[0].mxu0
      %954 = vdwg.mxu0
      %v956 = vsel %vm856, %v870, 0
      %958 = vmatprep.subr.mxu0 0.0
      %959 = vmatpush1.msra.mxu0 %v871
      %960 = vmatprep.subr.mxu0 0.0
      %961 = vmatpush1.msra.mxu0 %v872
      %962 = vmatprep.subr.mxu0 0.0
      %963 = vmatpush1.msra.mxu0 %v873
      %964 = vmatprep.subr.mxu0 0.0
      %965 = vmatpush1.msra.mxu0 %v874
      %966 = vmatprep.subr.mxu0 0.0
      %967 = vmatpush1.msra.mxu0 0.0
      %968 = vmatprep.subr.mxu0 0.0
      %969 = vmatpush1.msra.mxu0 0.0
      %970 = vmatprep.subr.mxu0 0.0
      %971 = vmatpush1.msra.mxu0 0.0
      %972 = vmatprep.subr.mxu0 0.0
      %973 = vmatpush1.msra.mxu0 0.0
      %974 = vmatprep.subr.mxu0 0.0
      %975 = vmatpush1.msra.mxu0 0.0
      %976 = vmatprep.subr.mxu0 0.0
      %977 = vmatpush1.msra.mxu0 0.0
      %978 = vmatprep.subr.mxu0 0.0
      %979 = vmatpush1.msra.mxu0 0.0
      %980 = vmatprep.subr.mxu0 0.0
      %981 = vmatpush1.msra.mxu0 0.0
      %982 = vmatprep.subr.mxu0 0.0
      %983 = vmatpush1.msra.mxu0 0.0
      %984 = vmatprep.subr.mxu0 0.0
      %985 = vmatpush1.msra.mxu0 0.0
      %986 = vmatprep.subr.mxu0 0.0
      %987 = vmatpush1.msra.mxu0 0.0
      %988 = vmatprep.subr.mxu0 0.0
      %989 = vmatpush1.msra.mxu0 0.0
      %990 = vmatprep.subr.mxu0 0.0
      %991 = vmatpush1.msra.mxu0 0.0
      %992 = vmatprep.subr.mxu0 0.0
      %993 = vmatpush1.msra.mxu0 0.0
      %994 = vmatprep.subr.mxu0 0.0
      %995 = vmatpush1.msra.mxu0 0.0
      %996 = vmatprep.subr.mxu0 0.0
      %997 = vmatpush1.msra.mxu0 0.0
      %998 = vmatprep.subr.mxu0 0.0
      %999 = vmatpush1.msra.mxu0 0.0
      %1000 = vmatprep.subr.mxu0 0.0
      %1001 = vmatpush1.msra.mxu0 0.0
      %1002 = vmatprep.subr.mxu0 0.0
      %1003 = vmatpush1.msra.mxu0 0.0
      %1004 = vmatprep.subr.mxu0 0.0
      %1005 = vmatpush1.msra.mxu0 0.0
      %1006 = vmatprep.subr.mxu0 0.0
      %1007 = vmatpush1.msra.mxu0 0.0
      %1008 = vmatprep.subr.mxu0 0.0
      %1009 = vmatpush1.msra.mxu0 0.0
      %1010 = vmatprep.subr.mxu0 0.0
      %1011 = vmatpush1.msra.mxu0 0.0
      %1012 = vmatprep.subr.mxu0 0.0
      %1013 = vmatpush1.msra.mxu0 0.0
      %1014 = vmatprep.subr.mxu0 0.0
      %1015 = vmatpush1.msra.mxu0 0.0
      %1016 = vmatprep.subr.mxu0 0.0
      %1017 = vmatpush1.msra.mxu0 0.0
      %1018 = vmatprep.subr.mxu0 0.0
      %1019 = vmatpush1.msra.mxu0 0.0
      %1020 = vmatprep.subr.mxu0 0.0
      %1021 = vmatpush1.msra.mxu0 0.0
      %1022 = vmatprep.mubr.f32.mxu0 0.0
      %1023 = vmatmul.mubr.f32.gmra.mrb[0].mxu0 %v956
      %v1024 = vpop.f32.mrb[0].mxu0
      %v1025 = vadd.f32 %v952, %v1024
      %v1026 = vpop.f32.mrb[0].mxu0
      %1027 = vdwg.mxu0
      %v1028 = vld [vmem:[#allocation14] sm:$0x1]
      %v1030 = vlaneseq
      %v1031 = vshrl.u32 %v1030, 7
      %v1032 = vsub.s32 0, %v1031
      %v1033 = vrot.slane %v1028, %v1032
      %v1035 = vadd.f32 %v1025, %v1033
      %v1036 = vmax.f32 %v1035, 0.0
      %v1037 = vld [vmem:[#allocation15] sm:$0xff]
      %v1038 = vld [vmem:[#allocation15 + $0x8] sm:$0xff]
      %v1039 = vld [vmem:[#allocation15 + $0x10] sm:$0xff]
      %v1040 = vld [vmem:[#allocation15 + $0x18] sm:$0xff]
      %v1041 = vld [vmem:[#allocation15 + $0x20] sm:$0xff]
      %v1042 = vld [vmem:[#allocation15 + $0x28] sm:$0xff]
      %v1043 = vld [vmem:[#allocation15 + $0x30] sm:$0xff]
      %v1044 = vld [vmem:[#allocation15 + $0x38] sm:$0xff]
      %v1045 = vld [vmem:[#allocation17] sm:$0x1]
      %v1047 = vlaneseq
      %v1048 = vshrl.u32 %v1047, 7
      %v1049 = vsub.s32 0, %v1048
      %v1050 = vrot.slane %v1045, %v1049
      %vm1052 = vcmask 523264
      %v1054 = vsel %vm1052, %v1036, 0
      %1056 = vmatprep.subr.mxu0 0.0
      %1057 = vmatpush1.msra.mxu0 %v1037
      %1058 = vmatprep.subr.mxu0 0.0
      %1059 = vmatpush1.msra.mxu0 %v1038
      %1060 = vmatprep.subr.mxu0 0.0
      %1061 = vmatpush1.msra.mxu0 %v1039
      %1062 = vmatprep.subr.mxu0 0.0
      %1063 = vmatpush1.msra.mxu0 %v1040
      %1064 = vmatprep.subr.mxu0 0.0
      %1065 = vmatpush1.msra.mxu0 %v1041
      %1066 = vmatprep.subr.mxu0 0.0
      %1067 = vmatpush1.msra.mxu0 %v1042
      %1068 = vmatprep.subr.mxu0 0.0
      %1069 = vmatpush1.msra.mxu0 %v1043
      %1070 = vmatprep.subr.mxu0 0.0
      %1071 = vmatpush1.msra.mxu0 %v1044
      %1072 = vmatprep.subr.mxu0 0.0
      %1073 = vmatpush1.msra.mxu0 0.0
      %1074 = vmatprep.subr.mxu0 0.0
      %1075 = vmatpush1.msra.mxu0 0.0
      %1076 = vmatprep.subr.mxu0 0.0
      %1077 = vmatpush1.msra.mxu0 0.0
      %1078 = vmatprep.subr.mxu0 0.0
      %1079 = vmatpush1.msra.mxu0 0.0
      %1080 = vmatprep.subr.mxu0 0.0
      %1081 = vmatpush1.msra.mxu0 0.0
      %1082 = vmatprep.subr.mxu0 0.0
      %1083 = vmatpush1.msra.mxu0 0.0
      %1084 = vmatprep.subr.mxu0 0.0
      %1085 = vmatpush1.msra.mxu0 0.0
      %1086 = vmatprep.subr.mxu0 0.0
      %1087 = vmatpush1.msra.mxu0 0.0
      %1088 = vmatprep.subr.mxu0 0.0
      %1089 = vmatpush1.msra.mxu0 0.0
      %1090 = vmatprep.subr.mxu0 0.0
      %1091 = vmatpush1.msra.mxu0 0.0
      %1092 = vmatprep.subr.mxu0 0.0
      %1093 = vmatpush1.msra.mxu0 0.0
      %1094 = vmatprep.subr.mxu0 0.0
      %1095 = vmatpush1.msra.mxu0 0.0
      %1096 = vmatprep.subr.mxu0 0.0
      %1097 = vmatpush1.msra.mxu0 0.0
      %1098 = vmatprep.subr.mxu0 0.0
      %1099 = vmatpush1.msra.mxu0 0.0
      %1100 = vmatprep.subr.mxu0 0.0
      %1101 = vmatpush1.msra.mxu0 0.0
      %1102 = vmatprep.subr.mxu0 0.0
      %1103 = vmatpush1.msra.mxu0 0.0
      %1104 = vmatprep.subr.mxu0 0.0
      %1105 = vmatpush1.msra.mxu0 0.0
      %1106 = vmatprep.subr.mxu0 0.0
      %1107 = vmatpush1.msra.mxu0 0.0
      %1108 = vmatprep.subr.mxu0 0.0
      %1109 = vmatpush1.msra.mxu0 0.0
      %1110 = vmatprep.subr.mxu0 0.0
      %1111 = vmatpush1.msra.mxu0 0.0
      %1112 = vmatprep.subr.mxu0 0.0
      %1113 = vmatpush1.msra.mxu0 0.0
      %1114 = vmatprep.subr.mxu0 0.0
      %1115 = vmatpush1.msra.mxu0 0.0
      %1116 = vmatprep.subr.mxu0 0.0
      %1117 = vmatpush1.msra.mxu0 0.0
      %1118 = vmatprep.subr.mxu0 0.0
      %1119 = vmatpush1.msra.mxu0 0.0
      %1120 = vmatprep.mubr.f32.mxu0 0.0
      %1121 = vmatmul.mubr.f32.gmra.mrb[0].mxu0 %v1054
      %v1122 = vpop.f32.mrb[0].mxu0
      %v1123 = vadd.f32 %v1050, %v1122
      %v1124 = vpop.f32.mrb[0].mxu0
      %1125 = vdwg.mxu0
      %1126 = vst [vmem:[#allocation18] sm:$0xff] %v1123
    $region81: #{critic_forward.1} parent=1 // pred_fallthru
      _
    // Predicated region
    $region82: #{critic_forward.1} parent=1 // pred_check
      _
    $region83: #{critic_forward.1} parent=1 // pred_check_branch
      %1128 = sbr.rel (0) target = $region85
    $region84: #{critic_forward.1} parent=1 // pred_region
      %s1130 = ssub.s32 128, 128
      %1131 = vsyncadd [#allocation5], %s1130
      %s1133 = sshll.u32 [#allocation18], 4
      %s1134 = int_to_ptr.vmem [resolvable:$true] %s1133
      %1136 = dma.vmem_to_hbm [thread:$0]  %s1134, 128, %s9, [#allocation5]
    $region85: #{critic_forward.1} parent=1 // pred_fallthru
      _
    // Predicated region
    $region86: #{critic_forward.1} parent=1 // pred_check
      _
    $region87: #{critic_forward.1} parent=1 // pred_check_branch
      %1138 = sbr.rel (0) target = $region89
    $region88: #{critic_forward.1} parent=1 // pred_region
      %1139 = dma.done [#allocation5], 128
    $region89: #{critic_forward.1} parent=1 // pred_fallthru
      _
    %1140 = vsyncpa [#allocation4], 1
    %1141 = vsyncpa [#allocation7], 1
    %1142 = vsyncpa [#allocation10], 1
    %1143 = vsyncpa [#allocation13], 1
    %1144 = vsyncpa [#allocation16], 1
    %1145 = vsyncpa [#allocation5], 1

</llo_original>
